<compile_context>
chip_gen: v6e
topology: v6e:2x2x1
jax: 0.10.0
libtpu: 0.0.40
codegen_flags: <defaults>
</compile_context>

<pallas_src>
import math

import jax
import jax.numpy as jnp
from jax.experimental import pallas as pl
from jax.experimental.pallas import tpu as pltpu

SUBLANE = 8  # vreg sublane rows (second-to-last dim granularity)


def _round_up(x, m):
    return (x + m - 1) // m * m


def qnetwork_kernel(x_ref, w1_ref, b1_ref, w2_ref, b2_ref, w3_ref, b3_ref, o_ref):
    """Fused forward: relu(x@W1+b1) -> relu(.@W2+b2) -> .@W3+b3.

    x tile arrives f32 and is cast to bf16 in-kernel (hides under the DMA);
    matmul operands are bf16, accumulation / bias / ReLU are f32; the output is
    stored f32 at its true (narrow) action width.
    """
    x = x_ref[...].astype(jnp.bfloat16)
    h1 = jnp.dot(x, w1_ref[...], preferred_element_type=jnp.float32) + b1_ref[...]
    h1 = jnp.maximum(h1, 0.0)
    h2 = jnp.dot(h1.astype(w2_ref.dtype), w2_ref[...],
                 preferred_element_type=jnp.float32) + b2_ref[...]
    h2 = jnp.maximum(h2, 0.0)
    o_ref[...] = jnp.dot(h2.astype(w3_ref.dtype), w3_ref[...],
                         preferred_element_type=jnp.float32) + b3_ref[...]


def qnetwork_forward(x, params, *, block_b=2048):
    """x: (B, state_size) float32. params: dict of w1,b1,w2,b2,w3,b3 (f32)."""
    x = jnp.asarray(x, jnp.float32)
    B, state_size = x.shape
    w1, b1 = params["w1"], params["b1"]
    w2, b2 = params["w2"], params["b2"]
    w3, b3 = params["w3"], params["b3"]
    fc1, fc2 = w1.shape[1], w2.shape[1]
    action_size = w3.shape[1]

    # Batch tile: large to amortize per-step overhead, but capped at ~B/2 so the
    # grid has >= 2 steps when B is big enough (keeps both v7x TCs busy).
    tm = min(_round_up(block_b, SUBLANE),
             max(SUBLANE, _round_up(pl.cdiv(B, 2), SUBLANE)))
    grid = (pl.cdiv(B, tm),)  # Pallas masks the ragged last block; no x padding.

    # bf16 weights for the MXU (tiny, one-shot cast); biases stay f32.
    w1b = w1.astype(jnp.bfloat16)
    w2b = w2.astype(jnp.bfloat16)
    w3b = w3.astype(jnp.bfloat16)

    def full(a):
        nd = a.ndim
        return pl.BlockSpec(a.shape, lambda i, _nd=nd: (0,) * _nd)

    # True work, not padded shapes (advisory scheduling hint).
    flops = 2 * B * (state_size * fc1 + fc1 * fc2 + fc2 * action_size)
    bytes_accessed = (
        x.size * 4
        + (w1b.size + w2b.size + w3b.size) * 2
        + (b1.size + b2.size + b3.size) * 4
        + B * action_size * 4
    )

    out = pl.pallas_call(
        qnetwork_kernel,
        out_shape=jax.ShapeDtypeStruct((B, action_size), jnp.float32),
        grid=grid,
        in_specs=[
            pl.BlockSpec((tm, state_size), lambda i: (i, 0)),  # x: tiled over batch
            full(w1b), full(b1),                               # weights VMEM-resident
            full(w2b), full(b2),
            full(w3b), full(b3),
        ],
        out_specs=pl.BlockSpec((tm, action_size), lambda i: (i, 0)),
        compiler_params=pltpu.CompilerParams(
            dimension_semantics=("parallel",),                 # megacore on v7x
        ),
        cost_estimate=pl.CostEstimate(
            flops=flops, transcendentals=0, bytes_accessed=bytes_accessed),
    )(x, w1b, b1, w2b, b2, w3b, b3)

    return out


def init_qnetwork_params(key, state_size, action_size, fc1_units=64, fc2_units=64):
    """PyTorch nn.Linear default init (uniform +/- 1/sqrt(fan_in)); weights (in, out)."""
    keys = jax.random.split(key, 6)

    def linear(kw, kb, fan_in, fan_out):
        bound = 1.0 / math.sqrt(fan_in)
        w = jax.random.uniform(kw, (fan_in, fan_out), jnp.float32, -bound, bound)
        b = jax.random.uniform(kb, (1, fan_out), jnp.float32, -bound, bound)
        return w, b

    w1, b1 = linear(keys[0], keys[1], state_size, fc1_units)
    w2, b2 = linear(keys[2], keys[3], fc1_units, fc2_units)
    w3, b3 = linear(keys[4], keys[5], fc2_units, action_size)
    return {"w1": w1, "b1": b1, "w2": w2, "b2": b2, "w3": w3, "b3": b3}


def _ref_forward(x, params):
    """Pure-JAX reference with the same bf16 operand rounding as the kernel."""
    bf = lambda a: a.astype(jnp.bfloat16).astype(jnp.float32)
    h1 = jnp.maximum(bf(x) @ bf(params["w1"]) + params["b1"], 0.0)
    h2 = jnp.maximum(bf(h1) @ bf(params["w2"]) + params["b2"], 0.0)
    return bf(h2) @ bf(params["w3"]) + params["b3"]


if __name__ == "__main__":
    # Small shapes consistent with QNetwork(state_size, action_size).
    B, STATE_SIZE, ACTION_SIZE = 2, 8, 4
    key = jax.random.PRNGKey(0)
    k_params, k_x, k_big = jax.random.split(key, 3)

    params = init_qnetwork_params(k_params, STATE_SIZE, ACTION_SIZE)
    x = jax.random.normal(k_x, (B, STATE_SIZE), dtype=jnp.float32)

    out = jax.block_until_ready(qnetwork_forward(x, params))
    ref = _ref_forward(x, params)
    assert out.shape == (B, ACTION_SIZE)
    assert jnp.allclose(out, ref, atol=1e-3, rtol=1e-3)

    # Larger, non-multiple batch: exercises the ragged last block + >=2 grid steps.
    xb = jax.random.normal(k_big, (300, STATE_SIZE), dtype=jnp.float32)
    out_b = jax.block_until_ready(qnetwork_forward(xb, params, block_b=128))
    ref_b = _ref_forward(xb, params)
    assert out_b.shape == (300, ACTION_SIZE)
    assert jnp.allclose(out_b, ref_b, atol=1e-3, rtol=1e-3)

    print("KERNEL_OK")
</pallas_src>

<mosaic_0001>
module attributes {stable_mosaic.version = 11 : i64} {
  func.func @qnetwork_kernel(%arg0: i32, %arg1: memref<8x8xf32, #tpu.memory_space<vmem>>, %arg2: memref<8x64xbf16, #tpu.memory_space<vmem>>, %arg3: memref<1x64xf32, #tpu.memory_space<vmem>>, %arg4: memref<64x64xbf16, #tpu.memory_space<vmem>>, %arg5: memref<1x64xf32, #tpu.memory_space<vmem>>, %arg6: memref<64x4xbf16, #tpu.memory_space<vmem>>, %arg7: memref<1x4xf32, #tpu.memory_space<vmem>>, %arg8: memref<8x4xf32, #tpu.memory_space<vmem>>) attributes {dimension_semantics = [#tpu.dimension_semantics<parallel>], iteration_bounds = array<i64: 1>, scalar_prefetch = 0 : i64, scratch_operands = 0 : i64, tpu.core_type = #tpu.core_type<tc>, window_params = [{transform_indices = @transform_0, window_bounds = array<i64: 8, 8>}, {pipeline_mode = #tpu.pipeline_mode<synchronous>, transform_indices = @transform_1, window_bounds = array<i64: 8, 64>}, {pipeline_mode = #tpu.pipeline_mode<synchronous>, transform_indices = @transform_2, window_bounds = array<i64: 1, 64>}, {pipeline_mode = #tpu.pipeline_mode<synchronous>, transform_indices = @transform_3, window_bounds = array<i64: 64, 64>}, {pipeline_mode = #tpu.pipeline_mode<synchronous>, transform_indices = @transform_4, window_bounds = array<i64: 1, 64>}, {pipeline_mode = #tpu.pipeline_mode<synchronous>, transform_indices = @transform_5, window_bounds = array<i64: 64, 4>}, {pipeline_mode = #tpu.pipeline_mode<synchronous>, transform_indices = @transform_6, window_bounds = array<i64: 1, 4>}, {transform_indices = @transform_7, window_bounds = array<i64: 8, 4>}]} {
    %c0 = arith.constant 0 : index
    %c0_0 = arith.constant 0 : index
    %0 = vector.load %arg1[%c0, %c0_0] : memref<8x8xf32, #tpu.memory_space<vmem>>, vector<8x8xf32>
    %1 = arith.truncf %0 : vector<8x8xf32> to vector<8x8xbf16>
    %c0_1 = arith.constant 0 : index
    %c0_2 = arith.constant 0 : index
    %2 = vector.load %arg2[%c0_1, %c0_2] : memref<8x64xbf16, #tpu.memory_space<vmem>>, vector<8x64xbf16>
    %cst = arith.constant dense<0.000000e+00> : vector<8x64xf32>
    %3 = tpu.matmul %1, %2, %cst {dimension_numbers = #tpu.dot_dimension_numbers<[1], [0], [0], [1], [0, 0, 1, 1], [], []>} : vector<8x8xbf16>, vector<8x64xbf16>, vector<8x64xf32> -> vector<8x64xf32>
    %c0_3 = arith.constant 0 : index
    %c0_4 = arith.constant 0 : index
    %4 = vector.load %arg3[%c0_3, %c0_4] : memref<1x64xf32, #tpu.memory_space<vmem>>, vector<1x64xf32>
    %5 = vector.broadcast %4 : vector<1x64xf32> to vector<8x64xf32>
    %6 = arith.addf %3, %5 : vector<8x64xf32>
    %cst_5 = arith.constant 0.000000e+00 : f32
    %7 = vector.broadcast %cst_5 : f32 to vector<8x64xf32>
    %8 = arith.maximumf %6, %7 : vector<8x64xf32>
    %9 = arith.truncf %8 : vector<8x64xf32> to vector<8x64xbf16>
    %c0_6 = arith.constant 0 : index
    %c0_7 = arith.constant 0 : index
    %10 = vector.load %arg4[%c0_6, %c0_7] : memref<64x64xbf16, #tpu.memory_space<vmem>>, vector<64x64xbf16>
    %cst_8 = arith.constant dense<0.000000e+00> : vector<8x64xf32>
    %11 = tpu.matmul %9, %10, %cst_8 {dimension_numbers = #tpu.dot_dimension_numbers<[1], [0], [0], [1], [0, 0, 1, 1], [], []>} : vector<8x64xbf16>, vector<64x64xbf16>, vector<8x64xf32> -> vector<8x64xf32>
    %c0_9 = arith.constant 0 : index
    %c0_10 = arith.constant 0 : index
    %12 = vector.load %arg5[%c0_9, %c0_10] : memref<1x64xf32, #tpu.memory_space<vmem>>, vector<1x64xf32>
    %13 = vector.broadcast %12 : vector<1x64xf32> to vector<8x64xf32>
    %14 = arith.addf %11, %13 : vector<8x64xf32>
    %cst_11 = arith.constant 0.000000e+00 : f32
    %15 = vector.broadcast %cst_11 : f32 to vector<8x64xf32>
    %16 = arith.maximumf %14, %15 : vector<8x64xf32>
    %17 = arith.truncf %16 : vector<8x64xf32> to vector<8x64xbf16>
    %c0_12 = arith.constant 0 : index
    %c0_13 = arith.constant 0 : index
    %18 = vector.load %arg6[%c0_12, %c0_13] : memref<64x4xbf16, #tpu.memory_space<vmem>>, vector<64x4xbf16>
    %cst_14 = arith.constant dense<0.000000e+00> : vector<8x4xf32>
    %19 = tpu.matmul %17, %18, %cst_14 {dimension_numbers = #tpu.dot_dimension_numbers<[1], [0], [0], [1], [0, 0, 1, 1], [], []>} : vector<8x64xbf16>, vector<64x4xbf16>, vector<8x4xf32> -> vector<8x4xf32>
    %c0_15 = arith.constant 0 : index
    %c0_16 = arith.constant 0 : index
    %20 = vector.load %arg7[%c0_15, %c0_16] : memref<1x4xf32, #tpu.memory_space<vmem>>, vector<1x4xf32>
    %21 = vector.broadcast %20 : vector<1x4xf32> to vector<8x4xf32>
    %22 = arith.addf %19, %21 : vector<8x4xf32>
    %c0_17 = arith.constant 0 : index
    %c0_18 = arith.constant 0 : index
    %23 = vector.load %arg8[%c0_17, %c0_18] : memref<8x4xf32, #tpu.memory_space<vmem>>, vector<8x4xf32>
    tpu.vector_store %arg8[%c0_17, %c0_18], %22 {strides = array<i32>} : memref<8x4xf32, #tpu.memory_space<vmem>>, vector<8x4xf32>,
    return
  }
  func.func @transform_0(%arg0: i32) -> (i32, i32) {
    %c0_i32 = arith.constant 0 : i32
    %c0_i32_0 = arith.constant 0 : i32
    return %arg0, %c0_i32 : i32, i32
  }
  func.func @transform_1(%arg0: i32) -> (i32, i32) {
    %c0_i32 = arith.constant 0 : i32
    %c0_i32_0 = arith.constant 0 : i32
    %c0_i32_1 = arith.constant 0 : i32
    return %c0_i32, %c0_i32_0 : i32, i32
  }
  func.func @transform_2(%arg0: i32) -> (i32, i32) {
    %c0_i32 = arith.constant 0 : i32
    %c0_i32_0 = arith.constant 0 : i32
    %c0_i32_1 = arith.constant 0 : i32
    return %c0_i32, %c0_i32_0 : i32, i32
  }
  func.func @transform_3(%arg0: i32) -> (i32, i32) {
    %c0_i32 = arith.constant 0 : i32
    %c0_i32_0 = arith.constant 0 : i32
    %c0_i32_1 = arith.constant 0 : i32
    return %c0_i32, %c0_i32_0 : i32, i32
  }
  func.func @transform_4(%arg0: i32) -> (i32, i32) {
    %c0_i32 = arith.constant 0 : i32
    %c0_i32_0 = arith.constant 0 : i32
    %c0_i32_1 = arith.constant 0 : i32
    return %c0_i32, %c0_i32_0 : i32, i32
  }
  func.func @transform_5(%arg0: i32) -> (i32, i32) {
    %c0_i32 = arith.constant 0 : i32
    %c0_i32_0 = arith.constant 0 : i32
    %c0_i32_1 = arith.constant 0 : i32
    return %c0_i32, %c0_i32_0 : i32, i32
  }
  func.func @transform_6(%arg0: i32) -> (i32, i32) {
    %c0_i32 = arith.constant 0 : i32
    %c0_i32_0 = arith.constant 0 : i32
    %c0_i32_1 = arith.constant 0 : i32
    return %c0_i32, %c0_i32_0 : i32, i32
  }
  func.func @transform_7(%arg0: i32) -> (i32, i32) {
    %c0_i32 = arith.constant 0 : i32
    %c0_i32_0 = arith.constant 0 : i32
    return %arg0, %c0_i32 : i32, i32
  }
}

</mosaic_0001>

<llo_original>
// kernel: tpu_custom_call.1
$region0: #{tpu_custom_call.1}
  #allocation0 [shape = 'u32[]', space=smem, size = 0x4, offset = 0x4, fixed_abs, tag = 'smem constant byte address 0x4 - core index']
  #allocation1 [shape = 'u32[144,128]{1,0:T(1,128)}', space=vmem, size = 0x12000, scoped, tag = 'internal scratch']
  %s0 = inlined_call_operand.vmem [shape: f32[2,8], index: 0, kind: input, shape index: {}]
  %s1 = inlined_call_operand.vmem [shape: bf16[8,64], index: 1, kind: input, shape index: {}]
  %s2 = inlined_call_operand.vmem [shape: f32[1,64], index: 2, kind: input, shape index: {}]
  %s3 = inlined_call_operand.vmem [shape: bf16[64,64], index: 3, kind: input, shape index: {}]
  %s4 = inlined_call_operand.hbm [shape: f32[1,64], index: 4, kind: input, shape index: {}]
  %s5 = inlined_call_operand.vmem [shape: bf16[64,4], index: 5, kind: input, shape index: {}]
  %s6 = inlined_call_operand.vmem [shape: f32[1,4], index: 6, kind: input, shape index: {}]
  %s7 = inlined_call_operand.hbm [shape: f32[2,4], index: 7, kind: output, shape index: {}]
  %s8 = sld [smem:[#allocation0]]
  $region42: #{tpu_custom_call.1} parent=0
    _
  %s10 = ssub.s32 1, %s8
  %s11 = scalar_select 0, %s10, %s8
  $region1: #{tpu_custom_call.1} parent=0
    #allocation2 [shape = 'u8[512]{0}', space=vmem, size = 0x400, scoped, tag = 'input window, operand 4, single buffered']
    #allocation3 [shape = 's32[1]{0}', space=sflag, size = 0x4, scoped, tag = 'scoped memory for tpu_custom_call.1']
    #allocation4 [shape = 's32[1]{0}', space=sflag, size = 0x4, scoped, tag = 'scoped memory for tpu_custom_call.1']
    #allocation5 [shape = 'u8[4096]{0}', space=vmem, size = 0x1000, scoped, tag = 'output window, operand 0, single buffered']
    %12 = vsyncpa [#allocation3], 0
    %13 = vsyncpa [#allocation4], 0
    // Predicated region
    $region2: #{tpu_custom_call.1} parent=1 // pred_check
      _
    $region3: #{tpu_custom_call.1} parent=1 // pred_check_branch
      %15 = sbr.rel (0) target = $region5
    $region4: #{tpu_custom_call.1} parent=1 // pred_region
      _
    $region5: #{tpu_custom_call.1} parent=1 // pred_fallthru
      _
    // Predicated region
    $region6: #{tpu_custom_call.1} parent=1 // pred_check
      _
    $region7: #{tpu_custom_call.1} parent=1 // pred_check_branch
      %17 = sbr.rel (0) target = $region9
    $region8: #{tpu_custom_call.1} parent=1 // pred_region
      _
    $region9: #{tpu_custom_call.1} parent=1 // pred_fallthru
      _
    // Predicated region
    $region10: #{tpu_custom_call.1} parent=1 // pred_check
      _
    $region11: #{tpu_custom_call.1} parent=1 // pred_check_branch
      %19 = sbr.rel (0) target = $region13
    $region12: #{tpu_custom_call.1} parent=1 // pred_region
      _
    $region13: #{tpu_custom_call.1} parent=1 // pred_fallthru
      _
    // Predicated region
    $region14: #{tpu_custom_call.1} parent=1 // pred_check
      _
    $region15: #{tpu_custom_call.1} parent=1 // pred_check_branch
      %21 = sbr.rel (0) target = $region17
    $region16: #{tpu_custom_call.1} parent=1 // pred_region
      _
    $region17: #{tpu_custom_call.1} parent=1 // pred_fallthru
      _
    // Predicated region
    $region18: #{tpu_custom_call.1} parent=1 // pred_check
      _
    $region19: #{tpu_custom_call.1} parent=1 // pred_check_branch
      %23 = sbr.rel (0) target = $region21
    $region20: #{tpu_custom_call.1} parent=1 // pred_region
      %s25 = ssub.s32 16, 16
      %26 = vsyncadd [#allocation3], %s25
      %s28 = sshll.u32 [#allocation2], 4
      %s29 = int_to_ptr.vmem [resolvable:$true] %s28
      %31 = dma.hbm_to_vmem [thread:$0]  %s4, 16, %s29, [#allocation3]
    $region21: #{tpu_custom_call.1} parent=1 // pred_fallthru
      _
    // Predicated region
    $region22: #{tpu_custom_call.1} parent=1 // pred_check
      _
    $region23: #{tpu_custom_call.1} parent=1 // pred_check_branch
      %33 = sbr.rel (0) target = $region25
    $region24: #{tpu_custom_call.1} parent=1 // pred_region
      _
    $region25: #{tpu_custom_call.1} parent=1 // pred_fallthru
      _
    // Predicated region
    $region26: #{tpu_custom_call.1} parent=1 // pred_check
      _
    $region27: #{tpu_custom_call.1} parent=1 // pred_check_branch
      %35 = sbr.rel (0) target = $region29
    $region28: #{tpu_custom_call.1} parent=1 // pred_region
      _
    $region29: #{tpu_custom_call.1} parent=1 // pred_fallthru
      _
    // Predicated region
    $region30: #{tpu_custom_call.1} parent=1 // pred_check
      _
    $region31: #{tpu_custom_call.1} parent=1 // pred_check_branch
      %37 = sbr.rel (0) target = $region33
    $region32: #{tpu_custom_call.1} parent=1 // pred_region
      %38 = dma.done [#allocation3], 16
    $region33: #{tpu_custom_call.1} parent=1 // pred_fallthru
      _
    %v40 = vld [vmem:[%s0] sm:$0xff]
    %v41 = vpack.c.bf16 %v40, %v40
    %v42 = vld [vmem:[%s1] sm:$0xf]
    %v43 = vld [vmem:[%s2] sm:$0x1]
    %v45 = vlaneseq
    %v46 = vshrl.u32 %v45, 7
    %v47 = vsub.s32 0, %v46
    %v48 = vrot.slane %v43, %v47
    %vm50 = vcmask 64512
    %v52 = vsel %vm50, %v41, 0
    %vm54 = vcmask 1043456
    %v56 = vsel %vm54, %v42, 0
    %58 = vmatprep.subr.bf16.mxu0 0
    %59 = vmatpush1.bf16.msra.mxu0 0
    %60 = vmatprep.subr.bf16.mxu0 0
    %61 = vmatpush1.bf16.msra.mxu0 0
    %62 = vmatprep.subr.bf16.mxu0 0
    %63 = vmatpush1.bf16.msra.mxu0 0
    %64 = vmatprep.subr.bf16.mxu0 0
    %65 = vmatpush1.bf16.msra.mxu0 0
    %66 = vmatprep.subr.bf16.mxu0 0
    %67 = vmatpush1.bf16.msra.mxu0 0
    %68 = vmatprep.subr.bf16.mxu0 0
    %69 = vmatpush1.bf16.msra.mxu0 0
    %70 = vmatprep.subr.bf16.mxu0 0
    %71 = vmatpush1.bf16.msra.mxu0 0
    %72 = vmatprep.subr.bf16.mxu0 0
    %73 = vmatpush1.bf16.msra.mxu0 %v56
    %74 = vmatprep.subr.bf16.mxu0 0
    %75 = vmatpush2.bf16.msra.mxu0 0
    %76 = vmatprep.subr.bf16.mxu0 0
    %77 = vmatpush2.bf16.msra.mxu0 0
    %78 = vmatprep.subr.bf16.mxu0 0
    %79 = vmatpush2.bf16.msra.mxu0 0
    %80 = vmatprep.subr.bf16.mxu0 0
    %81 = vmatpush2.bf16.msra.mxu0 0
    %82 = vmatprep.subr.bf16.mxu0 0
    %83 = vmatpush2.bf16.msra.mxu0 0
    %84 = vmatprep.subr.bf16.mxu0 0
    %85 = vmatpush2.bf16.msra.mxu0 0
    %86 = vmatprep.subr.bf16.mxu0 0
    %87 = vmatpush2.bf16.msra.mxu0 0
    %88 = vmatprep.subr.bf16.mxu0 0
    %89 = vmatpush2.bf16.msra.mxu0 0
    %90 = vmatprep.mubr.bf16.mxu0 0
    %91 = vmatmul.mubr.bf16.gmra.mxu0 %v52
    %v92 = vpop.f32.mrf.mxu0
    %v93 = vadd.f32 %v48, %v92
    %v94 = vpop.f32.mrf.mxu0
    %v95 = vpop.f32.mrf.mxu0
    %v96 = vpop.f32.mrf.mxu0
    %97 = vdwg.mxu0
    %v98 = vmax.f32 %v93, 0.0
    %v99 = vpack.c.bf16 %v98, %v98
    %v100 = vld [vmem:[%s3] sm:$0xf]
    %v101 = vld [vmem:[%s3 + $0x4] sm:$0xf]
    %v102 = vld [vmem:[%s3 + $0x8] sm:$0xf]
    %v103 = vld [vmem:[%s3 + $0xc] sm:$0xf]
    %v104 = vld [vmem:[%s3 + $0x10] sm:$0xf]
    %v105 = vld [vmem:[%s3 + $0x14] sm:$0xf]
    %v106 = vld [vmem:[%s3 + $0x18] sm:$0xf]
    %v107 = vld [vmem:[%s3 + $0x1c] sm:$0xf]
    %v108 = vld [vmem:[#allocation2] sm:$0x1]
    %v110 = vlaneseq
    %v111 = vshrl.u32 %v110, 7
    %v112 = vsub.s32 0, %v111
    %v113 = vrot.slane %v108, %v112
    %v123 = vunpack.c.l.b16 %v100
    %v124 = vunpack.c.l.b16 %v101
    %v125 = vunpack.c.l.b16 %v102
    %v126 = vunpack.c.l.b16 %v103
    %v127 = vunpack.c.l.b16 %v104
    %v128 = vunpack.c.l.b16 %v105
    %v129 = vunpack.c.l.b16 %v106
    %v130 = vunpack.c.l.b16 %v107
    %v131 = vpack.c.b16 %v124, %v123
    %v132 = vpack.c.b16 %v126, %v125
    %v133 = vpack.c.b16 %v128, %v127
    %v134 = vpack.c.b16 %v130, %v129
    %vm139 = vcmask 523264
    %v141 = vsel %vm139, %v99, 0
    %143 = vmatprep.subr.bf16.mxu0 0
    %144 = vmatpush1.bf16.msra.mxu0 0
    %145 = vmatprep.subr.bf16.mxu0 0
    %146 = vmatpush1.bf16.msra.mxu0 0
    %147 = vmatprep.subr.bf16.mxu0 0
    %148 = vmatpush1.bf16.msra.mxu0 0
    %149 = vmatprep.subr.bf16.mxu0 0
    %150 = vmatpush1.bf16.msra.mxu0 0
    %151 = vmatprep.subr.bf16.mxu0 0
    %152 = vmatpush1.bf16.msra.mxu0 %v134
    %153 = vmatprep.subr.bf16.mxu0 0
    %154 = vmatpush1.bf16.msra.mxu0 %v133
    %155 = vmatprep.subr.bf16.mxu0 0
    %156 = vmatpush1.bf16.msra.mxu0 %v132
    %157 = vmatprep.subr.bf16.mxu0 0
    %158 = vmatpush1.bf16.msra.mxu0 %v131
    %159 = vmatprep.subr.bf16.mxu0 0
    %160 = vmatpush2.bf16.msra.mxu0 0
    %161 = vmatprep.subr.bf16.mxu0 0
    %162 = vmatpush2.bf16.msra.mxu0 0
    %163 = vmatprep.subr.bf16.mxu0 0
    %164 = vmatpush2.bf16.msra.mxu0 0
    %165 = vmatprep.subr.bf16.mxu0 0
    %166 = vmatpush2.bf16.msra.mxu0 0
    %167 = vmatprep.subr.bf16.mxu0 0
    %168 = vmatpush2.bf16.msra.mxu0 0
    %169 = vmatprep.subr.bf16.mxu0 0
    %170 = vmatpush2.bf16.msra.mxu0 0
    %171 = vmatprep.subr.bf16.mxu0 0
    %172 = vmatpush2.bf16.msra.mxu0 0
    %173 = vmatprep.subr.bf16.mxu0 0
    %174 = vmatpush2.bf16.msra.mxu0 0
    %175 = vmatprep.mubr.bf16.mxu0 0
    %176 = vmatmul.mubr.bf16.gmra.mxu0 %v141
    %v177 = vpop.f32.mrf.mxu0
    %v178 = vadd.f32 %v113, %v177
    %v179 = vpop.f32.mrf.mxu0
    %v180 = vpop.f32.mrf.mxu0
    %v181 = vpop.f32.mrf.mxu0
    %182 = vdwg.mxu0
    %v183 = vmax.f32 %v178, 0.0
    %v184 = vpack.c.bf16 %v183, %v183
    %v185 = vld [vmem:[%s5] sm:$0xf]
    %v186 = vld [vmem:[%s5 + $0x4] sm:$0xf]
    %v187 = vld [vmem:[%s5 + $0x8] sm:$0xf]
    %v188 = vld [vmem:[%s5 + $0xc] sm:$0xf]
    %v189 = vld [vmem:[%s5 + $0x10] sm:$0xf]
    %v190 = vld [vmem:[%s5 + $0x14] sm:$0xf]
    %v191 = vld [vmem:[%s5 + $0x18] sm:$0xf]
    %v192 = vld [vmem:[%s5 + $0x1c] sm:$0xf]
    %v193 = vld [vmem:[%s6] sm:$0x1]
    %v195 = vlaneseq
    %v196 = vshrl.u32 %v195, 7
    %v197 = vsub.s32 0, %v196
    %v198 = vrot.slane %v193, %v197
    %v208 = vunpack.c.l.b16 %v185
    %v209 = vunpack.c.l.b16 %v186
    %v210 = vunpack.c.l.b16 %v187
    %v211 = vunpack.c.l.b16 %v188
    %v212 = vunpack.c.l.b16 %v189
    %v213 = vunpack.c.l.b16 %v190
    %v214 = vunpack.c.l.b16 %v191
    %v215 = vunpack.c.l.b16 %v192
    %v216 = vpack.c.b16 %v209, %v208
    %v217 = vpack.c.b16 %v211, %v210
    %v218 = vpack.c.b16 %v213, %v212
    %v219 = vpack.c.b16 %v215, %v214
    %v225 = vsel %vm139, %v184, 0
    %227 = vmatprep.subr.bf16.mxu0 0
    %228 = vmatpush1.bf16.msra.mxu0 0
    %229 = vmatprep.subr.bf16.mxu0 0
    %230 = vmatpush1.bf16.msra.mxu0 0
    %231 = vmatprep.subr.bf16.mxu0 0
    %232 = vmatpush1.bf16.msra.mxu0 0
    %233 = vmatprep.subr.bf16.mxu0 0
    %234 = vmatpush1.bf16.msra.mxu0 0
    %235 = vmatprep.subr.bf16.mxu0 0
    %236 = vmatpush1.bf16.msra.mxu0 %v219
    %237 = vmatprep.subr.bf16.mxu0 0
    %238 = vmatpush1.bf16.msra.mxu0 %v218
    %239 = vmatprep.subr.bf16.mxu0 0
    %240 = vmatpush1.bf16.msra.mxu0 %v217
    %241 = vmatprep.subr.bf16.mxu0 0
    %242 = vmatpush1.bf16.msra.mxu0 %v216
    %243 = vmatprep.subr.bf16.mxu0 0
    %244 = vmatpush2.bf16.msra.mxu0 0
    %245 = vmatprep.subr.bf16.mxu0 0
    %246 = vmatpush2.bf16.msra.mxu0 0
    %247 = vmatprep.subr.bf16.mxu0 0
    %248 = vmatpush2.bf16.msra.mxu0 0
    %249 = vmatprep.subr.bf16.mxu0 0
    %250 = vmatpush2.bf16.msra.mxu0 0
    %251 = vmatprep.subr.bf16.mxu0 0
    %252 = vmatpush2.bf16.msra.mxu0 0
    %253 = vmatprep.subr.bf16.mxu0 0
    %254 = vmatpush2.bf16.msra.mxu0 0
    %255 = vmatprep.subr.bf16.mxu0 0
    %256 = vmatpush2.bf16.msra.mxu0 0
    %257 = vmatprep.subr.bf16.mxu0 0
    %258 = vmatpush2.bf16.msra.mxu0 0
    %259 = vmatprep.mubr.bf16.mxu0 0
    %260 = vmatmul.mubr.bf16.gmra.mxu0 %v225
    %v261 = vpop.f32.mrf.mxu0
    %v262 = vadd.f32 %v198, %v261
    %v263 = vpop.f32.mrf.mxu0
    %v264 = vpop.f32.mrf.mxu0
    %v265 = vpop.f32.mrf.mxu0
    %266 = vdwg.mxu0
    %vm267 = vcmask 31744
    %268 = vst.msk [vmem:[#allocation5] sm:$0xff] %vm267, %v262
    // Predicated region
    $region34: #{tpu_custom_call.1} parent=1 // pred_check
      _
    $region35: #{tpu_custom_call.1} parent=1 // pred_check_branch
      %270 = sbr.rel (0) target = $region37
    $region36: #{tpu_custom_call.1} parent=1 // pred_region
      %s272 = ssub.s32 128, 32
      %273 = vsyncadd [#allocation4], %s272
      %s274 = sshll.u32 [#allocation5], 4
      %s275 = int_to_ptr.vmem [resolvable:$true] %s274
      %280 = dma.vmem_to_hbm [thread:$0]  %s275, 32, %s7, [#allocation4], 32, 32, 2
    $region37: #{tpu_custom_call.1} parent=1 // pred_fallthru
      _
    // Predicated region
    $region38: #{tpu_custom_call.1} parent=1 // pred_check
      _
    $region39: #{tpu_custom_call.1} parent=1 // pred_check_branch
      %282 = sbr.rel (0) target = $region41
    $region40: #{tpu_custom_call.1} parent=1 // pred_region
      %283 = dma.done [#allocation4], 128
    $region41: #{tpu_custom_call.1} parent=1 // pred_fallthru
      _
    %284 = vsyncpa [#allocation3], 1
    %285 = vsyncpa [#allocation4], 1

</llo_original>
